<compile_context>
chip_gen: v6e
topology: v6e:2x2x1
jax: 0.10.0
libtpu: 0.0.40
codegen_flags: <defaults>
</compile_context>

<pallas_src>
import math

import jax
import jax.numpy as jnp
from jax.experimental import pallas as pl
from jax.experimental.pallas import tpu as pltpu


def _make_conv_kernel(KH, KW, stride, Ho, Wo, Hs, Ws, C_in, C_out):
    """Fused implicit-GEMM conv + bias + ReLU for one batch image."""

    def kernel(x_ref, w_ref, b_ref, o_ref):
        # x_ref: (1, stride*stride*Hs, Ws, C_in) bf16  space-to-depth parity planes
        # w_ref: (KH*KW*C_in, C_out)             bf16  resident across the grid
        # b_ref: (1, C_out)                      f32   resident
        # o_ref: (1, Ho, Wo, C_out)              out_dtype
        cols = []
        for kh in range(KH):
            for kw in range(KW):
                p = (kh % stride) * stride + (kw % stride)   # parity plane index
                r0 = p * Hs + kh // stride                    # shifted, contiguous rows
                c0 = kw // stride
                xt = x_ref[0, r0:r0 + Ho, c0:c0 + Wo, :]      # (Ho, Wo, C_in), static slice
                cols.append(xt.reshape(Ho * Wo, C_in))
        # In-VMEM im2col: (Ho*Wo, KH*KW*C_in).  Never materialized in HBM.
        patches = jnp.concatenate(cols, axis=-1)
        # Single MXU matmul over the full K; f32 accumulate.
        acc = jnp.dot(patches, w_ref[...], preferred_element_type=jnp.float32)
        y = jnp.maximum(acc + b_ref[...], 0.0)                # bias + ReLU, f32
        o_ref[...] = y.reshape(1, Ho, Wo, C_out).astype(o_ref.dtype)

    return kernel


def conv2d_relu(x, weight, bias, *, stride=2, padding=1, out_dtype=jnp.float32):
    """PyTorch-equivalent forward: relu(Conv2d(x, weight, bias, stride, padding)).

    x:      (N, C_in, H, W)        float32  (NCHW, as in PyTorch)
    weight: (C_out, C_in, KH, KW)  float32  (OIHW, as in PyTorch)
    bias:   (C_out,)               float32
    returns (N, C_out, Ho, Wo)     out_dtype
    """
    N, C_in, H, W = x.shape
    C_out, C_in2, KH, KW = weight.shape
    assert C_in == C_in2
    Ho = (H + 2 * padding - KH) // stride + 1
    Wo = (W + 2 * padding - KW) // stride + 1
    Hs = Ho + (KH - 1) // stride          # rows per parity plane (incl. +shift halo)
    Ws = Wo + (KW - 1) // stride
    P = stride * stride                   # number of parity planes
    Hp, Wp = stride * Hs, stride * Ws     # padded extent consumed by the kernel

    # ---- single O(input) producer pass (transpose + pad + s2d + cast; no expansion) ----
    x_nhwc = jnp.transpose(x, (0, 2, 3, 1)).astype(jnp.bfloat16)
    pad_b = max(0, Hp - H - padding)
    pad_r = max(0, Wp - W - padding)
    x_pad = jnp.pad(x_nhwc, ((0, 0), (padding, pad_b), (padding, pad_r), (0, 0)))
    x_pad = x_pad[:, :Hp, :Wp, :]         # crop rows/cols the conv never reads
    # x_s2d[n, (a*stride+b)*Hs + i, j, c] == x_pad[n, i*stride + a, j*stride + b, c]
    x_s2d = (x_pad.reshape(N, Hs, stride, Ws, stride, C_in)
                  .transpose(0, 2, 4, 1, 3, 5)
                  .reshape(N, P * Hs, Ws, C_in))

    # weight OIHW -> (KH, KW, C_in, C_out) -> (K, C_out); K-order matches the tap concat.
    w_mat = (jnp.transpose(weight, (2, 3, 1, 0))
                .reshape(KH * KW * C_in, C_out).astype(jnp.bfloat16))
    b_row = bias.astype(jnp.float32).reshape(1, C_out)

    kernel = _make_conv_kernel(KH, KW, stride, Ho, Wo, Hs, Ws, C_in, C_out)

    flops = 2 * N * Ho * Wo * KH * KW * C_in * C_out
    bytes_accessed = (x_s2d.size * 2 + w_mat.size * 2 + b_row.size * 4
                      + N * Ho * Wo * C_out * jnp.dtype(out_dtype).itemsize)

    out_nhwc = pl.pallas_call(
        kernel,
        out_shape=jax.ShapeDtypeStruct((N, Ho, Wo, C_out), out_dtype),
        grid_spec=pltpu.PrefetchScalarGridSpec(
            num_scalar_prefetch=0,
            grid=(N,),
            in_specs=[
                # one batch image per grid step (parity planes, full spatial extent)
                pl.BlockSpec((1, P * Hs, Ws, C_in), lambda n: (n, 0, 0, 0)),
                # weight: full array, constant index_map -> resident, fetched once
                pl.BlockSpec((KH * KW * C_in, C_out), lambda n: (0, 0)),
                # bias: resident
                pl.BlockSpec((1, C_out), lambda n: (0, 0)),
            ],
            out_specs=pl.BlockSpec((1, Ho, Wo, C_out), lambda n: (n, 0, 0, 0)),
        ),
        compiler_params=pltpu.CompilerParams(
            dimension_semantics=("parallel",)),
        cost_estimate=pl.CostEstimate(flops=flops, transcendentals=0,
                                      bytes_accessed=bytes_accessed),
    )(x_s2d, w_mat, b_row)

    # Back to NCHW (one small O(output) pass; disappears in an NHWC/bf16 pipeline).
    return jnp.transpose(out_nhwc, (0, 3, 1, 2))


def init_conv_params(key, in_c, out_c, kh=3, kw=3):
    """Matches the module's init: kaiming_uniform_(weight) (a=0) via init_func,
    Conv2d-default uniform bias init U(-1/sqrt(fan_in), 1/sqrt(fan_in))."""
    kw_key, kb_key = jax.random.split(key)
    fan_in = in_c * kh * kw
    bound_w = math.sqrt(6.0 / fan_in)
    weight = jax.random.uniform(kw_key, (out_c, in_c, kh, kw), jnp.float32,
                                minval=-bound_w, maxval=bound_w)
    bound_b = 1.0 / math.sqrt(fan_in)
    bias = jax.random.uniform(kb_key, (out_c,), jnp.float32,
                              minval=-bound_b, maxval=bound_b)
    return weight, bias


if __name__ == "__main__":
    # Small shapes consistent with the module (K = 3*3*16 = 144, C_out = 32).
    N, C_in, H, W = 2, 16, 16, 16
    C_out = 32

    key = jax.random.PRNGKey(0)
    kx, kp = jax.random.split(key)
    x = jax.random.normal(kx, (N, C_in, H, W), jnp.float32)
    weight, bias = init_conv_params(kp, C_in, C_out)

    fwd = jax.jit(lambda x, w, b: conv2d_relu(x, w, b))
    out = jax.block_until_ready(fwd(x, weight, bias))

    # Reference: f32 conv -> bias -> ReLU (PyTorch forward semantics).
    ref = jax.lax.conv_general_dilated(
        x, weight, window_strides=(2, 2), padding=((1, 1), (1, 1)),
        dimension_numbers=("NCHW", "OIHW", "NCHW"))
    ref = jnp.maximum(ref + bias[None, :, None, None], 0.0)

    assert out.shape == ref.shape == (N, C_out, 8, 8), out.shape
    # bf16 inputs with f32 accumulation -> loose tolerance vs the f32 reference.
    max_err = float(jnp.max(jnp.abs(out - ref)))
    assert jnp.allclose(out, ref, atol=5e-2, rtol=5e-2), max_err

    print("KERNEL_OK")
</pallas_src>

<mosaic_0001>
module attributes {stable_mosaic.version = 11 : i64} {
  func.func @kernel(%arg0: i32, %arg1: memref<1x36x9x16xbf16, #tpu.memory_space<vmem>>, %arg2: memref<144x32xbf16, #tpu.memory_space<vmem>>, %arg3: memref<1x32xf32, #tpu.memory_space<vmem>>, %arg4: memref<1x8x8x32xf32, #tpu.memory_space<vmem>>) attributes {dimension_semantics = [#tpu.dimension_semantics<parallel>], iteration_bounds = array<i64: 2>, scalar_prefetch = 0 : i64, scratch_operands = 0 : i64, tpu.core_type = #tpu.core_type<tc>, window_params = [{transform_indices = @transform_0, window_bounds = array<i64: 1, 36, 9, 16>}, {pipeline_mode = #tpu.pipeline_mode<synchronous>, transform_indices = @transform_1, window_bounds = array<i64: 144, 32>}, {pipeline_mode = #tpu.pipeline_mode<synchronous>, transform_indices = @transform_2, window_bounds = array<i64: 1, 32>}, {transform_indices = @transform_3, window_bounds = array<i64: 1, 8, 8, 32>}]} {
    %c0 = arith.constant 0 : index
    %c0_0 = arith.constant 0 : index
    %c0_1 = arith.constant 0 : index
    %c0_2 = arith.constant 0 : index
    %0 = vector.load %arg1[%c0, %c0_0, %c0_1, %c0_2] : memref<1x36x9x16xbf16, #tpu.memory_space<vmem>>, vector<1x8x8x16xbf16>
    %1 = vector.shape_cast %0 : vector<1x8x8x16xbf16> to vector<8x8x16xbf16>
    %2 = vector.shape_cast %1 : vector<8x8x16xbf16> to vector<64x16xbf16>
    %c0_3 = arith.constant 0 : index
    %c9 = arith.constant 9 : index
    %c0_4 = arith.constant 0 : index
    %c0_5 = arith.constant 0 : index
    %3 = vector.load %arg1[%c0_3, %c9, %c0_4, %c0_5] : memref<1x36x9x16xbf16, #tpu.memory_space<vmem>>, vector<1x8x8x16xbf16>
    %4 = vector.shape_cast %3 : vector<1x8x8x16xbf16> to vector<8x8x16xbf16>
    %5 = vector.shape_cast %4 : vector<8x8x16xbf16> to vector<64x16xbf16>
    %c0_6 = arith.constant 0 : index
    %c0_7 = arith.constant 0 : index
    %c1 = arith.constant 1 : index
    %c0_8 = arith.constant 0 : index
    %6 = vector.load %arg1[%c0_6, %c0_7, %c1, %c0_8] : memref<1x36x9x16xbf16, #tpu.memory_space<vmem>>, vector<1x8x8x16xbf16>
    %7 = vector.shape_cast %6 : vector<1x8x8x16xbf16> to vector<8x8x16xbf16>
    %8 = vector.shape_cast %7 : vector<8x8x16xbf16> to vector<64x16xbf16>
    %c0_9 = arith.constant 0 : index
    %c18 = arith.constant 18 : index
    %c0_10 = arith.constant 0 : index
    %c0_11 = arith.constant 0 : index
    %9 = vector.load %arg1[%c0_9, %c18, %c0_10, %c0_11] : memref<1x36x9x16xbf16, #tpu.memory_space<vmem>>, vector<1x8x8x16xbf16>
    %10 = vector.shape_cast %9 : vector<1x8x8x16xbf16> to vector<8x8x16xbf16>
    %11 = vector.shape_cast %10 : vector<8x8x16xbf16> to vector<64x16xbf16>
    %c0_12 = arith.constant 0 : index
    %c27 = arith.constant 27 : index
    %c0_13 = arith.constant 0 : index
    %c0_14 = arith.constant 0 : index
    %12 = vector.load %arg1[%c0_12, %c27, %c0_13, %c0_14] : memref<1x36x9x16xbf16, #tpu.memory_space<vmem>>, vector<1x8x8x16xbf16>
    %13 = vector.shape_cast %12 : vector<1x8x8x16xbf16> to vector<8x8x16xbf16>
    %14 = vector.shape_cast %13 : vector<8x8x16xbf16> to vector<64x16xbf16>
    %c0_15 = arith.constant 0 : index
    %c18_16 = arith.constant 18 : index
    %c1_17 = arith.constant 1 : index
    %c0_18 = arith.constant 0 : index
    %15 = vector.load %arg1[%c0_15, %c18_16, %c1_17, %c0_18] : memref<1x36x9x16xbf16, #tpu.memory_space<vmem>>, vector<1x8x8x16xbf16>
    %16 = vector.shape_cast %15 : vector<1x8x8x16xbf16> to vector<8x8x16xbf16>
    %17 = vector.shape_cast %16 : vector<8x8x16xbf16> to vector<64x16xbf16>
    %c0_19 = arith.constant 0 : index
    %c1_20 = arith.constant 1 : index
    %c0_21 = arith.constant 0 : index
    %c0_22 = arith.constant 0 : index
    %18 = vector.load %arg1[%c0_19, %c1_20, %c0_21, %c0_22] : memref<1x36x9x16xbf16, #tpu.memory_space<vmem>>, vector<1x8x8x16xbf16>
    %19 = vector.shape_cast %18 : vector<1x8x8x16xbf16> to vector<8x8x16xbf16>
    %20 = vector.shape_cast %19 : vector<8x8x16xbf16> to vector<64x16xbf16>
    %c0_23 = arith.constant 0 : index
    %c10 = arith.constant 10 : index
    %c0_24 = arith.constant 0 : index
    %c0_25 = arith.constant 0 : index
    %21 = vector.load %arg1[%c0_23, %c10, %c0_24, %c0_25] : memref<1x36x9x16xbf16, #tpu.memory_space<vmem>>, vector<1x8x8x16xbf16>
    %22 = vector.shape_cast %21 : vector<1x8x8x16xbf16> to vector<8x8x16xbf16>
    %23 = vector.shape_cast %22 : vector<8x8x16xbf16> to vector<64x16xbf16>
    %c0_26 = arith.constant 0 : index
    %c1_27 = arith.constant 1 : index
    %c1_28 = arith.constant 1 : index
    %c0_29 = arith.constant 0 : index
    %24 = vector.load %arg1[%c0_26, %c1_27, %c1_28, %c0_29] : memref<1x36x9x16xbf16, #tpu.memory_space<vmem>>, vector<1x8x8x16xbf16>
    %25 = vector.shape_cast %24 : vector<1x8x8x16xbf16> to vector<8x8x16xbf16>
    %26 = vector.shape_cast %25 : vector<8x8x16xbf16> to vector<64x16xbf16>
    %27 = tpu.concatenate %2, %5, %8, %11, %14, %17, %20, %23, %26 in 1 : vector<64x16xbf16>, vector<64x16xbf16>, vector<64x16xbf16>, vector<64x16xbf16>, vector<64x16xbf16>, vector<64x16xbf16>, vector<64x16xbf16>, vector<64x16xbf16>, vector<64x16xbf16> -> vector<64x144xbf16>
    %c0_30 = arith.constant 0 : index
    %c0_31 = arith.constant 0 : index
    %28 = vector.load %arg2[%c0_30, %c0_31] : memref<144x32xbf16, #tpu.memory_space<vmem>>, vector<144x32xbf16>
    %cst = arith.constant dense<0.000000e+00> : vector<64x32xf32>
    %29 = tpu.matmul %27, %28, %cst {dimension_numbers = #tpu.dot_dimension_numbers<[1], [0], [0], [1], [0, 0, 1, 1], [], []>} : vector<64x144xbf16>, vector<144x32xbf16>, vector<64x32xf32> -> vector<64x32xf32>
    %c0_32 = arith.constant 0 : index
    %c0_33 = arith.constant 0 : index
    %30 = vector.load %arg3[%c0_32, %c0_33] : memref<1x32xf32, #tpu.memory_space<vmem>>, vector<1x32xf32>
    %31 = vector.broadcast %30 : vector<1x32xf32> to vector<64x32xf32>
    %32 = arith.addf %29, %31 : vector<64x32xf32>
    %cst_34 = arith.constant 0.000000e+00 : f32
    %33 = vector.broadcast %cst_34 : f32 to vector<64x32xf32>
    %34 = arith.maximumf %32, %33 : vector<64x32xf32>
    %35 = vector.shape_cast %34 : vector<64x32xf32> to vector<1x8x8x32xf32>
    %c0_35 = arith.constant 0 : index
    %c0_36 = arith.constant 0 : index
    %c0_37 = arith.constant 0 : index
    %c0_38 = arith.constant 0 : index
    %36 = vector.load %arg4[%c0_35, %c0_36, %c0_37, %c0_38] : memref<1x8x8x32xf32, #tpu.memory_space<vmem>>, vector<1x8x8x32xf32>
    tpu.vector_store %arg4[%c0_35, %c0_36, %c0_37, %c0_38], %35 {strides = array<i32>} : memref<1x8x8x32xf32, #tpu.memory_space<vmem>>, vector<1x8x8x32xf32>,
    return
  }
  func.func @transform_0(%arg0: i32) -> (i32, i32, i32, i32) {
    %c0_i32 = arith.constant 0 : i32
    %c0_i32_0 = arith.constant 0 : i32
    %c0_i32_1 = arith.constant 0 : i32
    %c0_i32_2 = arith.constant 0 : i32
    return %arg0, %c0_i32, %c0_i32_0, %c0_i32_1 : i32, i32, i32, i32
  }
  func.func @transform_1(%arg0: i32) -> (i32, i32) {
    %c0_i32 = arith.constant 0 : i32
    %c0_i32_0 = arith.constant 0 : i32
    %c0_i32_1 = arith.constant 0 : i32
    return %c0_i32, %c0_i32_0 : i32, i32
  }
  func.func @transform_2(%arg0: i32) -> (i32, i32) {
    %c0_i32 = arith.constant 0 : i32
    %c0_i32_0 = arith.constant 0 : i32
    %c0_i32_1 = arith.constant 0 : i32
    return %c0_i32, %c0_i32_0 : i32, i32
  }
  func.func @transform_3(%arg0: i32) -> (i32, i32, i32, i32) {
    %c0_i32 = arith.constant 0 : i32
    %c0_i32_0 = arith.constant 0 : i32
    %c0_i32_1 = arith.constant 0 : i32
    %c0_i32_2 = arith.constant 0 : i32
    return %arg0, %c0_i32, %c0_i32_0, %c0_i32_1 : i32, i32, i32, i32
  }
}

</mosaic_0001>

<llo_original>
// kernel: _lambda_.1
$region0: #{_lambda_.1}
  #allocation0 [shape = 'u32[]', space=smem, size = 0x4, offset = 0x4, fixed_abs, tag = 'smem constant byte address 0x4 - core index']
  #allocation1 [shape = 'u32[144,128]{1,0:T(1,128)}', space=vmem, size = 0x12000, scoped, tag = 'internal scratch']
  %s0 = inlined_call_operand.vmem [shape: bf16[2,36,9,16], index: 0, kind: input, shape index: {}]
  %s1 = inlined_call_operand.vmem [shape: bf16[144,32], index: 1, kind: input, shape index: {}]
  %s2 = inlined_call_operand.vmem [shape: f32[1,32], index: 2, kind: input, shape index: {}]
  %s3 = inlined_call_operand.hbm [shape: f32[2,8,8,32], index: 3, kind: output, shape index: {}]
  %s4 = sld [smem:[#allocation0]]
  $region45: #{_lambda_.1} parent=0
    _
  %s6 = ssub.s32 1, %s4
  %s7 = scalar_select 0, %s6, %s4
  $region1: #{_lambda_.1} parent=0
    #allocation2 [shape = 'u8[65536]{0}', space=vmem, size = 0x10000, scoped, tag = 'output window, operand 0']
    #allocation3 [shape = 's32[2]{0}', space=sflag, size = 0x8, scoped, tag = 'scoped memory for _lambda_.1']
    %8 = vsyncpa [#allocation3], 0
    %s9 = scalar_lea.sflag [#allocation3], 1
    %10 = vsyncpa %s9, 0
    loop: start=0, step=1, limit=4
    $region2: #{_lambda_.1} parent=1 // loop_pre_header
      _
    $region3: #{_lambda_.1} parent=1 // loop_header
      %s12 = sphi 0, %s16
      %p13 = scmp.ge.s32.totalorder %s12, 4
      %s22 = sphi 0, %s24
      %s25 = sphi 0, %s22
      %s26 = sphi 0, %s25
      %s42 = sphi 0, %s26
      %s46 = sphi 0, %s46
      %s48 = sphi 0, %s46
      %s49 = sphi 0, %s48
      %s63 = sphi 0, %s49
      %s67 = sphi 0, %s67
      %s69 = sphi 0, %s67
      %s70 = sphi 0, %s69
      %s84 = sphi 0, %s70
      %s90 = sphi 0, %s92
      %s93 = sphi 0, %s90
      %s94 = sphi 0, %s93
      %s110 = sphi 0, %s94
    $region4: #{_lambda_.1} parent=1 // loop_header_branch
      %15 = sbr.rel (%p13) target = $region8
    $region5: #{_lambda_.1} parent=1 // loop_body
      %s17 = ssub.s32 %s12, 1
      %s18 = ssub.s32 %s12, 2
      %s19 = sadd.s32 %s12, 1
      %s20 = ssub.s32 %s12, %s19
      %p21 = scmp.eq.s32.totalorder %s20, 0
      %s23 = sadd.s32 %s22, 1
      %s24 = scalar_select %p21, %s22, %s23
      %p27 = pneg %p21
      %p28 = scmp.eq.s32.totalorder %s12, 1
      %p29 = por %p27, %p28
      %p30 = scmp.ne.s32.totalorder %s22, %s25
      %p31 = scmp.eq.s32.totalorder %s12, 0
      %p32 = por %p30, %p31
      %p33 = scmp.ne.s32.totalorder %s22, %s25
      %p34 = scmp.eq.s32.totalorder %s17, 1
      %p35 = por %p33, %p34
      %p36 = scmp.ne.s32.totalorder %s25, %s26
      %p37 = scmp.eq.s32.totalorder %s17, 0
      %p38 = por %p36, %p37
      %p39 = scmp.ne.s32.totalorder %s25, %s26
      %p40 = scmp.eq.s32.totalorder %s18, 1
      %p41 = por %p39, %p40
      %p43 = scmp.ne.s32.totalorder %s26, %s42
      %p44 = scmp.eq.s32.totalorder %s18, 0
      %p45 = por %p43, %p44
      %s47 = sadd.s32 %s46, 1
      %p50 = scmp.eq.s32.totalorder %s12, 1
      %p51 = scmp.ne.s32.totalorder %s46, %s48
      %p52 = scmp.eq.s32.totalorder %s12, 0
      %p53 = por %p51, %p52
      %p54 = scmp.ne.s32.totalorder %s46, %s48
      %p55 = scmp.eq.s32.totalorder %s17, 1
      %p56 = por %p54, %p55
      %p57 = scmp.ne.s32.totalorder %s48, %s49
      %p58 = scmp.eq.s32.totalorder %s17, 0
      %p59 = por %p57, %p58
      %p60 = scmp.ne.s32.totalorder %s48, %s49
      %p61 = scmp.eq.s32.totalorder %s18, 1
      %p62 = por %p60, %p61
      %p64 = scmp.ne.s32.totalorder %s49, %s63
      %p65 = scmp.eq.s32.totalorder %s18, 0
      %p66 = por %p64, %p65
      %s68 = sadd.s32 %s67, 1
      %p71 = scmp.eq.s32.totalorder %s12, 1
      %p72 = scmp.ne.s32.totalorder %s67, %s69
      %p73 = scmp.eq.s32.totalorder %s12, 0
      %p74 = por %p72, %p73
      %p75 = scmp.ne.s32.totalorder %s67, %s69
      %p76 = scmp.eq.s32.totalorder %s17, 1
      %p77 = por %p75, %p76
      %p78 = scmp.ne.s32.totalorder %s69, %s70
      %p79 = scmp.eq.s32.totalorder %s17, 0
      %p80 = por %p78, %p79
      %p81 = scmp.ne.s32.totalorder %s69, %s70
      %p82 = scmp.eq.s32.totalorder %s18, 1
      %p83 = por %p81, %p82
      %p85 = scmp.ne.s32.totalorder %s70, %s84
      %p86 = scmp.eq.s32.totalorder %s18, 0
      %p87 = por %p85, %p86
      %s88 = ssub.s32 %s12, %s19
      %p89 = scmp.eq.s32.totalorder %s88, 0
      %s91 = sadd.s32 %s90, 1
      %s92 = scalar_select %p89, %s90, %s91
      %p95 = pneg %p89
      %p96 = scmp.eq.s32.totalorder %s12, 1
      %p97 = por %p95, %p96
      %p98 = scmp.ne.s32.totalorder %s90, %s93
      %p99 = scmp.eq.s32.totalorder %s12, 0
      %p100 = por %p98, %p99
      %p101 = scmp.ne.s32.totalorder %s90, %s93
      %p102 = scmp.eq.s32.totalorder %s17, 1
      %p103 = por %p101, %p102
      %p104 = scmp.ne.s32.totalorder %s93, %s94
      %p105 = scmp.eq.s32.totalorder %s17, 0
      %p106 = por %p104, %p105
      %p107 = scmp.ne.s32.totalorder %s93, %s94
      %p108 = scmp.eq.s32.totalorder %s18, 1
      %p109 = por %p107, %p108
      %p111 = scmp.ne.s32.totalorder %s94, %s110
      %p112 = scmp.eq.s32.totalorder %s18, 0
      %p113 = por %p111, %p112
      %p114 = scmp.le.s32.totalorder 1, %s12
      %p115 = scmp.lt.s32.totalorder %s12, 3
      %p116 = pnand %p114, %p115
      %p117 = pneg %p116
      // Predicated region
      $region9: #{_lambda_.1} parent=5 // pred_check
        _
      $region10: #{_lambda_.1} parent=5 // pred_check_branch
        %119 = sbr.rel (%p116) target = $region12
      $region11: #{_lambda_.1} parent=5 // pred_region
        %s120 = ssub.s32 %s12, 1
        // Predicated region
        $region13: #{_lambda_.1} parent=11 // pred_check
          %p121 = pneg %p59
        $region14: #{_lambda_.1} parent=11 // pred_check_branch
          %123 = sbr.rel (%p121) target = $region16
        $region15: #{_lambda_.1} parent=11 // pred_region
          _
        $region16: #{_lambda_.1} parent=11 // pred_fallthru
          _
        // Predicated region
        $region17: #{_lambda_.1} parent=11 // pred_check
          %p124 = pneg %p80
        $region18: #{_lambda_.1} parent=11 // pred_check_branch
          %126 = sbr.rel (%p124) target = $region20
        $region19: #{_lambda_.1} parent=11 // pred_region
          _
        $region20: #{_lambda_.1} parent=11 // pred_fallthru
          _
      $region12: #{_lambda_.1} parent=5 // pred_fallthru
        _
      %p127 = scmp.lt.s32.totalorder %s12, 2
      // Predicated region
      $region21: #{_lambda_.1} parent=5 // pred_check
        %p128 = pneg %p127
      $region22: #{_lambda_.1} parent=5 // pred_check_branch
        %130 = sbr.rel (%p128) target = $region24
      $region23: #{_lambda_.1} parent=5 // pred_region
        // Predicated region
        $region25: #{_lambda_.1} parent=23 // pred_check
          %p131 = pneg %p32
        $region26: #{_lambda_.1} parent=23 // pred_check_branch
          %133 = sbr.rel (%p131) target = $region28
        $region27: #{_lambda_.1} parent=23 // pred_region
          %p134 = scmp.lt.s32.totalorder %s12, 1
          %s135 = scalar_select %p134, %s12, 1
          %s136 = smul.addr %s135, 72
          %s137 = smul.addr %s136, 4
          %s138 = scalar_lea.vmem %s0, %s137
        $region28: #{_lambda_.1} parent=23 // pred_fallthru
          _
      $region24: #{_lambda_.1} parent=5 // pred_fallthru
        _
      %p139 = scmp.le.s32.totalorder 1, %s12
      %p140 = scmp.lt.s32.totalorder %s12, 3
      %p141 = pnand %p139, %p140
      %p142 = pneg %p141
      // Predicated region
      $region29: #{_lambda_.1} parent=5 // pred_check
        _
      $region30: #{_lambda_.1} parent=5 // pred_check_branch
        %144 = sbr.rel (%p141) target = $region32
      $region31: #{_lambda_.1} parent=5 // pred_region
        %s145 = ssub.s32 %s12, 1
        %p146 = scmp.lt.s32.totalorder %s17, 1
        %s147 = scalar_select %p146, %s17, 1
        %s148 = smul.addr %s147, 72
        %s149 = smul.addr %s148, 4
        %s150 = scalar_lea.vmem %s0, %s149
        %p151 = pneg %p38
        %p152 = pneg %p35
        %p153 = pneg %p59
        %p154 = pneg %p56
        %p155 = pneg %p80
        %p156 = pneg %p77
        %p157 = pneg %p106
        %p158 = pneg %p103
        %s159 = sand.u32 %s93, 1
        %s160 = scalar_lea.sflag [#allocation3], %s159
        %s161 = sand.u32 %s93, 1
        %s162 = smul.addr %s161, 64
        %s163 = scalar_lea.vmem [#allocation2], %s162
        %p164 = scmp.lt.s32.totalorder %s17, 1
        %s165 = scalar_select %p164, %s17, 1
        %s166 = smul.addr %s165, 72
        %s167 = smul.addr %s166, 4
        %s168 = scalar_lea.vmem %s0, %s167
        %v170 = vld [vmem:[%s168] sm:$0xf]
        %v171 = vld [vmem:[%s168 + $0x8] sm:$0xf]
        %v172 = vld [vmem:[%s168 + $0x10] sm:$0xf]
        %v173 = vld [vmem:[%s168 + $0x18] sm:$0xf]
        %v174 = vld [vmem:[%s168 + $0x20] sm:$0xf]
        %v175 = vld [vmem:[%s168 + $0x28] sm:$0xf]
        %v176 = vld [vmem:[%s168 + $0x30] sm:$0xf]
        %v177 = vld [vmem:[%s168 + $0x38] sm:$0xf]
        %s178 = scalar_lea.vmem %s168, 72
        %v179 = vld [vmem:[%s178] sm:$0xf]
        %v180 = vld [vmem:[%s178 + $0x8] sm:$0xf]
        %v181 = vld [vmem:[%s178 + $0x10] sm:$0xf]
        %v182 = vld [vmem:[%s178 + $0x18] sm:$0xf]
        %v183 = vld [vmem:[%s178 + $0x20] sm:$0xf]
        %v184 = vld [vmem:[%s178 + $0x28] sm:$0xf]
        %v185 = vld [vmem:[%s178 + $0x30] sm:$0xf]
        %v186 = vld [vmem:[%s178 + $0x38] sm:$0xf]
        %v187 = vld [vmem:[%s168 + $0x4] sm:$0x1]
        %v188 = vld [vmem:[%s168 + $0xc] sm:$0x1]
        %v189 = vld [vmem:[%s168 + $0x14] sm:$0x1]
        %v190 = vld [vmem:[%s168 + $0x1c] sm:$0x1]
        %v191 = vld [vmem:[%s168 + $0x24] sm:$0x1]
        %v192 = vld [vmem:[%s168 + $0x2c] sm:$0x1]
        %v193 = vld [vmem:[%s168 + $0x34] sm:$0x1]
        %v194 = vld [vmem:[%s168 + $0x3c] sm:$0x1]
        %vm195 = vsmask.f32 3328
        %vm196 = vsmask.f32 7440
        %vm197 = vmor %vm195, %vm196
        %v199 = vshrl.u32 %v170, 16
        %v201 = vrot.slane %v199, 4
        %v202 = vshll.u32 %v170, 16
        %v204 = vrot.slane %v202, 5
        %v205 = vor.u32 %v201, %v204
        %v206 = vrot.slane %v205, 4
        %v208 = vshll.u32 %v187, 16
        %v210 = vrot.slane %v208, 5
        %v211 = vsel %vm197, %v206, %v210
        %v213 = vshrl.u32 %v171, 16
        %v215 = vrot.slane %v213, 4
        %v216 = vshll.u32 %v171, 16
        %v218 = vrot.slane %v216, 5
        %v219 = vor.u32 %v215, %v218
        %v220 = vrot.slane %v219, 4
        %v222 = vshll.u32 %v188, 16
        %v224 = vrot.slane %v222, 5
        %v225 = vsel %vm197, %v220, %v224
        %v227 = vshrl.u32 %v172, 16
        %v229 = vrot.slane %v227, 4
        %v230 = vshll.u32 %v172, 16
        %v232 = vrot.slane %v230, 5
        %v233 = vor.u32 %v229, %v232
        %v234 = vrot.slane %v233, 4
        %v236 = vshll.u32 %v189, 16
        %v238 = vrot.slane %v236, 5
        %v239 = vsel %vm197, %v234, %v238
        %v241 = vshrl.u32 %v173, 16
        %v243 = vrot.slane %v241, 4
        %v244 = vshll.u32 %v173, 16
        %v246 = vrot.slane %v244, 5
        %v247 = vor.u32 %v243, %v246
        %v248 = vrot.slane %v247, 4
        %v250 = vshll.u32 %v190, 16
        %v252 = vrot.slane %v250, 5
        %v253 = vsel %vm197, %v248, %v252
        %v255 = vshrl.u32 %v174, 16
        %v257 = vrot.slane %v255, 4
        %v258 = vshll.u32 %v174, 16
        %v260 = vrot.slane %v258, 5
        %v261 = vor.u32 %v257, %v260
        %v262 = vrot.slane %v261, 4
        %v264 = vshll.u32 %v191, 16
        %v266 = vrot.slane %v264, 5
        %v267 = vsel %vm197, %v262, %v266
        %v269 = vshrl.u32 %v175, 16
        %v271 = vrot.slane %v269, 4
        %v272 = vshll.u32 %v175, 16
        %v274 = vrot.slane %v272, 5
        %v275 = vor.u32 %v271, %v274
        %v276 = vrot.slane %v275, 4
        %v278 = vshll.u32 %v192, 16
        %v280 = vrot.slane %v278, 5
        %v281 = vsel %vm197, %v276, %v280
        %v283 = vshrl.u32 %v176, 16
        %v285 = vrot.slane %v283, 4
        %v286 = vshll.u32 %v176, 16
        %v288 = vrot.slane %v286, 5
        %v289 = vor.u32 %v285, %v288
        %v290 = vrot.slane %v289, 4
        %v292 = vshll.u32 %v193, 16
        %v294 = vrot.slane %v292, 5
        %v295 = vsel %vm197, %v290, %v294
        %v297 = vshrl.u32 %v177, 16
        %v299 = vrot.slane %v297, 4
        %v300 = vshll.u32 %v177, 16
        %v302 = vrot.slane %v300, 5
        %v303 = vor.u32 %v299, %v302
        %v304 = vrot.slane %v303, 4
        %v306 = vshll.u32 %v194, 16
        %v308 = vrot.slane %v306, 5
        %v309 = vsel %vm197, %v304, %v308
        %s310 = scalar_lea.vmem %s168, 144
        %v311 = vld [vmem:[%s310] sm:$0xf]
        %v312 = vld [vmem:[%s310 + $0x8] sm:$0xf]
        %v313 = vld [vmem:[%s310 + $0x10] sm:$0xf]
        %v314 = vld [vmem:[%s310 + $0x18] sm:$0xf]
        %v315 = vld [vmem:[%s310 + $0x20] sm:$0xf]
        %v316 = vld [vmem:[%s310 + $0x28] sm:$0xf]
        %v317 = vld [vmem:[%s310 + $0x30] sm:$0xf]
        %v318 = vld [vmem:[%s310 + $0x38] sm:$0xf]
        %s319 = scalar_lea.vmem %s168, 216
        %v320 = vld [vmem:[%s319] sm:$0xf]
        %v321 = vld [vmem:[%s319 + $0x8] sm:$0xf]
        %v322 = vld [vmem:[%s319 + $0x10] sm:$0xf]
        %v323 = vld [vmem:[%s319 + $0x18] sm:$0xf]
        %v324 = vld [vmem:[%s319 + $0x20] sm:$0xf]
        %v325 = vld [vmem:[%s319 + $0x28] sm:$0xf]
        %v326 = vld [vmem:[%s319 + $0x30] sm:$0xf]
        %v327 = vld [vmem:[%s319 + $0x38] sm:$0xf]
        %v328 = vld [vmem:[%s310 + $0x4] sm:$0x1]
        %v329 = vld [vmem:[%s310 + $0xc] sm:$0x1]
        %v330 = vld [vmem:[%s310 + $0x14] sm:$0x1]
        %v331 = vld [vmem:[%s310 + $0x1c] sm:$0x1]
        %v332 = vld [vmem:[%s310 + $0x24] sm:$0x1]
        %v333 = vld [vmem:[%s310 + $0x2c] sm:$0x1]
        %v334 = vld [vmem:[%s310 + $0x34] sm:$0x1]
        %v335 = vld [vmem:[%s310 + $0x3c] sm:$0x1]
        %v337 = vshrl.u32 %v311, 16
        %v339 = vrot.slane %v337, 4
        %v340 = vshll.u32 %v311, 16
        %v342 = vrot.slane %v340, 5
        %v343 = vor.u32 %v339, %v342
        %v344 = vrot.slane %v343, 4
        %v346 = vshll.u32 %v328, 16
        %v348 = vrot.slane %v346, 5
        %v349 = vsel %vm197, %v344, %v348
        %v351 = vshrl.u32 %v312, 16
        %v353 = vrot.slane %v351, 4
        %v354 = vshll.u32 %v312, 16
        %v356 = vrot.slane %v354, 5
        %v357 = vor.u32 %v353, %v356
        %v358 = vrot.slane %v357, 4
        %v360 = vshll.u32 %v329, 16
        %v362 = vrot.slane %v360, 5
        %v363 = vsel %vm197, %v358, %v362
        %v365 = vshrl.u32 %v313, 16
        %v367 = vrot.slane %v365, 4
        %v368 = vshll.u32 %v313, 16
        %v370 = vrot.slane %v368, 5
        %v371 = vor.u32 %v367, %v370
        %v372 = vrot.slane %v371, 4
        %v374 = vshll.u32 %v330, 16
        %v376 = vrot.slane %v374, 5
        %v377 = vsel %vm197, %v372, %v376
        %v379 = vshrl.u32 %v314, 16
        %v381 = vrot.slane %v379, 4
        %v382 = vshll.u32 %v314, 16
        %v384 = vrot.slane %v382, 5
        %v385 = vor.u32 %v381, %v384
        %v386 = vrot.slane %v385, 4
        %v388 = vshll.u32 %v331, 16
        %v390 = vrot.slane %v388, 5
        %v391 = vsel %vm197, %v386, %v390
        %v393 = vshrl.u32 %v315, 16
        %v395 = vrot.slane %v393, 4
        %v396 = vshll.u32 %v315, 16
        %v398 = vrot.slane %v396, 5
        %v399 = vor.u32 %v395, %v398
        %v400 = vrot.slane %v399, 4
        %v402 = vshll.u32 %v332, 16
        %v404 = vrot.slane %v402, 5
        %v405 = vsel %vm197, %v400, %v404
        %v407 = vshrl.u32 %v316, 16
        %v409 = vrot.slane %v407, 4
        %v410 = vshll.u32 %v316, 16
        %v412 = vrot.slane %v410, 5
        %v413 = vor.u32 %v409, %v412
        %v414 = vrot.slane %v413, 4
        %v416 = vshll.u32 %v333, 16
        %v418 = vrot.slane %v416, 5
        %v419 = vsel %vm197, %v414, %v418
        %v421 = vshrl.u32 %v317, 16
        %v423 = vrot.slane %v421, 4
        %v424 = vshll.u32 %v317, 16
        %v426 = vrot.slane %v424, 5
        %v427 = vor.u32 %v423, %v426
        %v428 = vrot.slane %v427, 4
        %v430 = vshll.u32 %v334, 16
        %v432 = vrot.slane %v430, 5
        %v433 = vsel %vm197, %v428, %v432
        %v435 = vshrl.u32 %v318, 16
        %v437 = vrot.slane %v435, 4
        %v438 = vshll.u32 %v318, 16
        %v440 = vrot.slane %v438, 5
        %v441 = vor.u32 %v437, %v440
        %v442 = vrot.slane %v441, 4
        %v444 = vshll.u32 %v335, 16
        %v446 = vrot.slane %v444, 5
        %v447 = vsel %vm197, %v442, %v446
        %s448 = scalar_lea.vmem %s168, 8
        %v449 = vld [vmem:[%s448] sm:$0xf]
        %v450 = vld [vmem:[%s448 + $0x8] sm:$0xf]
        %v451 = vld [vmem:[%s448 + $0x10] sm:$0xf]
        %v452 = vld [vmem:[%s448 + $0x18] sm:$0xf]
        %v453 = vld [vmem:[%s448 + $0x20] sm:$0xf]
        %v454 = vld [vmem:[%s448 + $0x28] sm:$0xf]
        %v455 = vld [vmem:[%s448 + $0x30] sm:$0xf]
        %v456 = vld [vmem:[%s448 + $0x38] sm:$0xf]
        %s457 = scalar_lea.vmem %s168, 80
        %v458 = vld [vmem:[%s457] sm:$0xf]
        %v459 = vld [vmem:[%s457 + $0x8] sm:$0xf]
        %v460 = vld [vmem:[%s457 + $0x10] sm:$0xf]
        %v461 = vld [vmem:[%s457 + $0x18] sm:$0xf]
        %v462 = vld [vmem:[%s457 + $0x20] sm:$0xf]
        %v463 = vld [vmem:[%s457 + $0x28] sm:$0xf]
        %v464 = vld [vmem:[%s457 + $0x30] sm:$0xf]
        %v465 = vld [vmem:[%s457 + $0x38] sm:$0xf]
        %v466 = vld [vmem:[%s448 + $0x4] sm:$0x1]
        %v467 = vld [vmem:[%s448 + $0xc] sm:$0x1]
        %v468 = vld [vmem:[%s448 + $0x14] sm:$0x1]
        %v469 = vld [vmem:[%s448 + $0x1c] sm:$0x1]
        %v470 = vld [vmem:[%s448 + $0x24] sm:$0x1]
        %v471 = vld [vmem:[%s448 + $0x2c] sm:$0x1]
        %v472 = vld [vmem:[%s448 + $0x34] sm:$0x1]
        %v473 = vld [vmem:[%s448 + $0x3c] sm:$0x1]
        %v475 = vshrl.u32 %v449, 16
        %v477 = vrot.slane %v475, 4
        %v478 = vshll.u32 %v449, 16
        %v480 = vrot.slane %v478, 5
        %v481 = vor.u32 %v477, %v480
        %v482 = vrot.slane %v481, 4
        %v484 = vshll.u32 %v466, 16
        %v486 = vrot.slane %v484, 5
        %v487 = vsel %vm197, %v482, %v486
        %v489 = vshrl.u32 %v450, 16
        %v491 = vrot.slane %v489, 4
        %v492 = vshll.u32 %v450, 16
        %v494 = vrot.slane %v492, 5
        %v495 = vor.u32 %v491, %v494
        %v496 = vrot.slane %v495, 4
        %v498 = vshll.u32 %v467, 16
        %v500 = vrot.slane %v498, 5
        %v501 = vsel %vm197, %v496, %v500
        %v503 = vshrl.u32 %v451, 16
        %v505 = vrot.slane %v503, 4
        %v506 = vshll.u32 %v451, 16
        %v508 = vrot.slane %v506, 5
        %v509 = vor.u32 %v505, %v508
        %v510 = vrot.slane %v509, 4
        %v512 = vshll.u32 %v468, 16
        %v514 = vrot.slane %v512, 5
        %v515 = vsel %vm197, %v510, %v514
        %v517 = vshrl.u32 %v452, 16
        %v519 = vrot.slane %v517, 4
        %v520 = vshll.u32 %v452, 16
        %v522 = vrot.slane %v520, 5
        %v523 = vor.u32 %v519, %v522
        %v524 = vrot.slane %v523, 4
        %v526 = vshll.u32 %v469, 16
        %v528 = vrot.slane %v526, 5
        %v529 = vsel %vm197, %v524, %v528
        %v531 = vshrl.u32 %v453, 16
        %v533 = vrot.slane %v531, 4
        %v534 = vshll.u32 %v453, 16
        %v536 = vrot.slane %v534, 5
        %v537 = vor.u32 %v533, %v536
        %v538 = vrot.slane %v537, 4
        %v540 = vshll.u32 %v470, 16
        %v542 = vrot.slane %v540, 5
        %v543 = vsel %vm197, %v538, %v542
        %v545 = vshrl.u32 %v454, 16
        %v547 = vrot.slane %v545, 4
        %v548 = vshll.u32 %v454, 16
        %v550 = vrot.slane %v548, 5
        %v551 = vor.u32 %v547, %v550
        %v552 = vrot.slane %v551, 4
        %v554 = vshll.u32 %v471, 16
        %v556 = vrot.slane %v554, 5
        %v557 = vsel %vm197, %v552, %v556
        %v559 = vshrl.u32 %v455, 16
        %v561 = vrot.slane %v559, 4
        %v562 = vshll.u32 %v455, 16
        %v564 = vrot.slane %v562, 5
        %v565 = vor.u32 %v561, %v564
        %v566 = vrot.slane %v565, 4
        %v568 = vshll.u32 %v472, 16
        %v570 = vrot.slane %v568, 5
        %v571 = vsel %vm197, %v566, %v570
        %v573 = vshrl.u32 %v456, 16
        %v575 = vrot.slane %v573, 4
        %v576 = vshll.u32 %v456, 16
        %v578 = vrot.slane %v576, 5
        %v579 = vor.u32 %v575, %v578
        %v580 = vrot.slane %v579, 4
        %v582 = vshll.u32 %v473, 16
        %v584 = vrot.slane %v582, 5
        %v585 = vsel %vm197, %v580, %v584
        %v594 = vunpack.c.l.b16 %v170
        %v595 = vunpack.c.l.b16 %v171
        %v596 = vunpack.c.l.b16 %v172
        %v597 = vunpack.c.l.b16 %v173
        %v598 = vunpack.c.l.b16 %v174
        %v599 = vunpack.c.l.b16 %v175
        %v600 = vunpack.c.l.b16 %v176
        %v601 = vunpack.c.l.b16 %v177
        %v602 = vpack.c.b16 %v595, %v594
        %v603 = vpack.c.b16 %v597, %v596
        %v604 = vpack.c.b16 %v599, %v598
        %v605 = vpack.c.b16 %v601, %v600
        %v614 = vunpack.c.l.b16 %v179
        %v615 = vunpack.c.l.b16 %v180
        %v616 = vunpack.c.l.b16 %v181
        %v617 = vunpack.c.l.b16 %v182
        %v618 = vunpack.c.l.b16 %v183
        %v619 = vunpack.c.l.b16 %v184
        %v620 = vunpack.c.l.b16 %v185
        %v621 = vunpack.c.l.b16 %v186
        %v622 = vpack.c.b16 %v615, %v614
        %v623 = vpack.c.b16 %v617, %v616
        %v624 = vpack.c.b16 %v619, %v618
        %v625 = vpack.c.b16 %v621, %v620
        %626 = vrot.lane.b32.xlu0 %v622, 16
        %v627 = vpop.permute.xlu0 %626
        %628 = vrot.lane.b32.xlu0 %v623, 16
        %v629 = vpop.permute.xlu0 %628
        %630 = vrot.lane.b32.xlu0 %v624, 16
        %v631 = vpop.permute.xlu0 %630
        %632 = vrot.lane.b32.xlu0 %v625, 16
        %v633 = vpop.permute.xlu0 %632
        %v634 = vunpack.c.l.b16 %v211
        %v635 = vunpack.c.l.b16 %v225
        %v636 = vunpack.c.l.b16 %v239
        %v637 = vunpack.c.l.b16 %v253
        %v638 = vunpack.c.l.b16 %v267
        %v639 = vunpack.c.l.b16 %v281
        %v640 = vunpack.c.l.b16 %v295
        %v641 = vunpack.c.l.b16 %v309
        %v642 = vpack.c.b16 %v635, %v634
        %v643 = vpack.c.b16 %v637, %v636
        %v644 = vpack.c.b16 %v639, %v638
        %v645 = vpack.c.b16 %v641, %v640
        %646 = vrot.lane.b32.xlu0 %v642, 32
        %v647 = vpop.permute.xlu0 %646
        %648 = vrot.lane.b32.xlu0 %v643, 32
        %v649 = vpop.permute.xlu0 %648
        %650 = vrot.lane.b32.xlu0 %v644, 32
        %v651 = vpop.permute.xlu0 %650
        %652 = vrot.lane.b32.xlu0 %v645, 32
        %v653 = vpop.permute.xlu0 %652
        %v662 = vunpack.c.l.b16 %v311
        %v663 = vunpack.c.l.b16 %v312
        %v664 = vunpack.c.l.b16 %v313
        %v665 = vunpack.c.l.b16 %v314
        %v666 = vunpack.c.l.b16 %v315
        %v667 = vunpack.c.l.b16 %v316
        %v668 = vunpack.c.l.b16 %v317
        %v669 = vunpack.c.l.b16 %v318
        %v670 = vpack.c.b16 %v663, %v662
        %v671 = vpack.c.b16 %v665, %v664
        %v672 = vpack.c.b16 %v667, %v666
        %v673 = vpack.c.b16 %v669, %v668
        %674 = vrot.lane.b32.xlu0 %v670, 48
        %v675 = vpop.permute.xlu0 %674
        %676 = vrot.lane.b32.xlu0 %v671, 48
        %v677 = vpop.permute.xlu0 %676
        %678 = vrot.lane.b32.xlu0 %v672, 48
        %v679 = vpop.permute.xlu0 %678
        %680 = vrot.lane.b32.xlu0 %v673, 48
        %v681 = vpop.permute.xlu0 %680
        %v690 = vunpack.c.l.b16 %v320
        %v691 = vunpack.c.l.b16 %v321
        %v692 = vunpack.c.l.b16 %v322
        %v693 = vunpack.c.l.b16 %v323
        %v694 = vunpack.c.l.b16 %v324
        %v695 = vunpack.c.l.b16 %v325
        %v696 = vunpack.c.l.b16 %v326
        %v697 = vunpack.c.l.b16 %v327
        %v698 = vpack.c.b16 %v691, %v690
        %v699 = vpack.c.b16 %v693, %v692
        %v700 = vpack.c.b16 %v695, %v694
        %v701 = vpack.c.b16 %v697, %v696
        %702 = vrot.lane.b32.xlu0 %v698, 64
        %v703 = vpop.permute.xlu0 %702
        %704 = vrot.lane.b32.xlu0 %v699, 64
        %v705 = vpop.permute.xlu0 %704
        %706 = vrot.lane.b32.xlu0 %v700, 64
        %v707 = vpop.permute.xlu0 %706
        %708 = vrot.lane.b32.xlu0 %v701, 64
        %v709 = vpop.permute.xlu0 %708
        %v710 = vunpack.c.l.b16 %v349
        %v711 = vunpack.c.l.b16 %v363
        %v712 = vunpack.c.l.b16 %v377
        %v713 = vunpack.c.l.b16 %v391
        %v714 = vunpack.c.l.b16 %v405
        %v715 = vunpack.c.l.b16 %v419
        %v716 = vunpack.c.l.b16 %v433
        %v717 = vunpack.c.l.b16 %v447
        %v718 = vpack.c.b16 %v711, %v710
        %v719 = vpack.c.b16 %v713, %v712
        %v720 = vpack.c.b16 %v715, %v714
        %v721 = vpack.c.b16 %v717, %v716
        %722 = vrot.lane.b32.xlu0 %v718, 80
        %v723 = vpop.permute.xlu0 %722
        %724 = vrot.lane.b32.xlu0 %v719, 80
        %v725 = vpop.permute.xlu0 %724
        %726 = vrot.lane.b32.xlu0 %v720, 80
        %v727 = vpop.permute.xlu0 %726
        %728 = vrot.lane.b32.xlu0 %v721, 80
        %v729 = vpop.permute.xlu0 %728
        %v738 = vunpack.c.l.b16 %v449
        %v739 = vunpack.c.l.b16 %v450
        %v740 = vunpack.c.l.b16 %v451
        %v741 = vunpack.c.l.b16 %v452
        %v742 = vunpack.c.l.b16 %v453
        %v743 = vunpack.c.l.b16 %v454
        %v744 = vunpack.c.l.b16 %v455
        %v745 = vunpack.c.l.b16 %v456
        %v746 = vpack.c.b16 %v739, %v738
        %v747 = vpack.c.b16 %v741, %v740
        %v748 = vpack.c.b16 %v743, %v742
        %v749 = vpack.c.b16 %v745, %v744
        %750 = vrot.lane.b32.xlu0 %v746, 96
        %v751 = vpop.permute.xlu0 %750
        %752 = vrot.lane.b32.xlu0 %v747, 96
        %v753 = vpop.permute.xlu0 %752
        %754 = vrot.lane.b32.xlu0 %v748, 96
        %v755 = vpop.permute.xlu0 %754
        %756 = vrot.lane.b32.xlu0 %v749, 96
        %v757 = vpop.permute.xlu0 %756
        %v766 = vunpack.c.l.b16 %v458
        %v767 = vunpack.c.l.b16 %v459
        %v768 = vunpack.c.l.b16 %v460
        %v769 = vunpack.c.l.b16 %v461
        %v770 = vunpack.c.l.b16 %v462
        %v771 = vunpack.c.l.b16 %v463
        %v772 = vunpack.c.l.b16 %v464
        %v773 = vunpack.c.l.b16 %v465
        %v774 = vpack.c.b16 %v767, %v766
        %v775 = vpack.c.b16 %v769, %v768
        %v776 = vpack.c.b16 %v771, %v770
        %v777 = vpack.c.b16 %v773, %v772
        %778 = vrot.lane.b32.xlu0 %v774, 112
        %v779 = vpop.permute.xlu0 %778
        %780 = vrot.lane.b32.xlu0 %v775, 112
        %v781 = vpop.permute.xlu0 %780
        %782 = vrot.lane.b32.xlu0 %v776, 112
        %v783 = vpop.permute.xlu0 %782
        %784 = vrot.lane.b32.xlu0 %v777, 112
        %v785 = vpop.permute.xlu0 %784
        %v786 = vunpack.c.l.b16 %v487
        %v787 = vunpack.c.l.b16 %v501
        %v788 = vunpack.c.l.b16 %v515
        %v789 = vunpack.c.l.b16 %v529
        %v790 = vunpack.c.l.b16 %v543
        %v791 = vunpack.c.l.b16 %v557
        %v792 = vunpack.c.l.b16 %v571
        %v793 = vunpack.c.l.b16 %v585
        %v794 = vpack.c.b16 %v787, %v786
        %v795 = vpack.c.b16 %v789, %v788
        %v796 = vpack.c.b16 %v791, %v790
        %v797 = vpack.c.b16 %v793, %v792
        %vm798 = vcmask 130048
        %v801 = vsel %vm798, %v602, %v627
        %v804 = vsel %vm798, %v603, %v629
        %v807 = vsel %vm798, %v604, %v631
        %v810 = vsel %vm798, %v605, %v633
        %vm811 = vcmask 261120
        %v813 = vsel %vm811, %v801, %v647
        %v815 = vsel %vm811, %v804, %v649
        %v817 = vsel %vm811, %v807, %v651
        %v819 = vsel %vm811, %v810, %v653
        %vm820 = vcmask 392192
        %v822 = vsel %vm820, %v813, %v675
        %v824 = vsel %vm820, %v815, %v677
        %v826 = vsel %vm820, %v817, %v679
        %v828 = vsel %vm820, %v819, %v681
        %vm829 = vcmask 523264
        %v831 = vsel %vm829, %v822, %v703
        %v833 = vsel %vm829, %v824, %v705
        %v835 = vsel %vm829, %v826, %v707
        %v837 = vsel %vm829, %v828, %v709
        %vm838 = vcmask 654336
        %v840 = vsel %vm838, %v831, %v723
        %v842 = vsel %vm838, %v833, %v725
        %v844 = vsel %vm838, %v835, %v727
        %v846 = vsel %vm838, %v837, %v729
        %vm847 = vcmask 785408
        %v849 = vsel %vm847, %v840, %v751
        %v851 = vsel %vm847, %v842, %v753
        %v853 = vsel %vm847, %v844, %v755
        %v855 = vsel %vm847, %v846, %v757
        %vm856 = vcmask 916480
        %v858 = vsel %vm856, %v849, %v779
        %v861 = vsel %vm856, %v851, %v781
        %v864 = vsel %vm856, %v853, %v783
        %v867 = vsel %vm856, %v855, %v785
        %v869 = vld [vmem:[%s1] sm:$0xf]
        %v870 = vld [vmem:[%s1 + $0x4] sm:$0xf]
        %v871 = vld [vmem:[%s1 + $0x8] sm:$0xf]
        %v872 = vld [vmem:[%s1 + $0xc] sm:$0xf]
        %v873 = vld [vmem:[%s1 + $0x10] sm:$0xf]
        %v874 = vld [vmem:[%s1 + $0x14] sm:$0xf]
        %v875 = vld [vmem:[%s1 + $0x18] sm:$0xf]
        %v876 = vld [vmem:[%s1 + $0x1c] sm:$0xf]
        %v877 = vld [vmem:[%s1 + $0x20] sm:$0xf]
        %v878 = vld [vmem:[%s1 + $0x24] sm:$0xf]
        %v879 = vld [vmem:[%s1 + $0x28] sm:$0xf]
        %v880 = vld [vmem:[%s1 + $0x2c] sm:$0xf]
        %v881 = vld [vmem:[%s1 + $0x30] sm:$0xf]
        %v882 = vld [vmem:[%s1 + $0x34] sm:$0xf]
        %v883 = vld [vmem:[%s1 + $0x38] sm:$0xf]
        %v884 = vld [vmem:[%s1 + $0x3c] sm:$0xf]
        %v885 = vld [vmem:[%s1 + $0x40] sm:$0xf]
        %v886 = vld [vmem:[%s1 + $0x44] sm:$0xf]
        %v887 = vld [vmem:[%s2] sm:$0x1]
        %v889 = vlaneseq
        %v890 = vshrl.u32 %v889, 7
        %v891 = vsub.s32 0, %v890
        %v892 = vrot.slane %v887, %v891
        %v912 = vunpack.c.l.b16 %v869
        %v913 = vunpack.c.l.b16 %v870
        %v914 = vunpack.c.l.b16 %v871
        %v915 = vunpack.c.l.b16 %v872
        %v916 = vunpack.c.l.b16 %v873
        %v917 = vunpack.c.l.b16 %v874
        %v918 = vunpack.c.l.b16 %v875
        %v919 = vunpack.c.l.b16 %v876
        %v920 = vunpack.c.l.b16 %v877
        %v921 = vunpack.c.l.b16 %v878
        %v922 = vunpack.c.l.b16 %v879
        %v923 = vunpack.c.l.b16 %v880
        %v924 = vunpack.c.l.b16 %v881
        %v925 = vunpack.c.l.b16 %v882
        %v926 = vunpack.c.l.b16 %v883
        %v927 = vunpack.c.l.b16 %v884
        %v928 = vunpack.c.l.b16 %v885
        %v929 = vunpack.c.l.b16 %v886
        %v930 = vpack.c.b16 %v913, %v912
        %v931 = vpack.c.b16 %v915, %v914
        %v932 = vpack.c.b16 %v917, %v916
        %v933 = vpack.c.b16 %v919, %v918
        %v934 = vpack.c.b16 %v921, %v920
        %v935 = vpack.c.b16 %v923, %v922
        %v936 = vpack.c.b16 %v925, %v924
        %v937 = vpack.c.b16 %v927, %v926
        %v938 = vpack.c.b16 %v929, %v928
        %v949 = vsel %vm798, %v794, 0
        %v952 = vsel %vm798, %v795, 0
        %v955 = vsel %vm798, %v796, 0
        %v958 = vsel %vm798, %v797, 0
        %960 = vmatprep.subr.bf16.mxu0 0
        %961 = vmatpush1.bf16.msra.mxu0 %v937
        %962 = vmatprep.subr.bf16.mxu0 0
        %963 = vmatpush1.bf16.msra.mxu0 %v936
        %964 = vmatprep.subr.bf16.mxu0 0
        %965 = vmatpush1.bf16.msra.mxu0 %v935
        %966 = vmatprep.subr.bf16.mxu0 0
        %967 = vmatpush1.bf16.msra.mxu0 %v934
        %968 = vmatprep.subr.bf16.mxu0 0
        %969 = vmatpush1.bf16.msra.mxu0 %v933
        %970 = vmatprep.subr.bf16.mxu0 0
        %971 = vmatpush1.bf16.msra.mxu0 %v932
        %972 = vmatprep.subr.bf16.mxu0 0
        %973 = vmatpush1.bf16.msra.mxu0 %v931
        %974 = vmatprep.subr.bf16.mxu0 0
        %975 = vmatpush1.bf16.msra.mxu0 %v930
        %976 = vmatprep.subr.bf16.mxu0 0
        %977 = vmatpush2.bf16.msra.mxu0 0
        %978 = vmatprep.subr.bf16.mxu0 0
        %979 = vmatpush2.bf16.msra.mxu0 0
        %980 = vmatprep.subr.bf16.mxu0 0
        %981 = vmatpush2.bf16.msra.mxu0 0
        %982 = vmatprep.subr.bf16.mxu0 0
        %983 = vmatpush2.bf16.msra.mxu0 0
        %984 = vmatprep.subr.bf16.mxu0 0
        %985 = vmatpush2.bf16.msra.mxu0 0
        %986 = vmatprep.subr.bf16.mxu0 0
        %987 = vmatpush2.bf16.msra.mxu0 0
        %988 = vmatprep.subr.bf16.mxu0 0
        %989 = vmatpush2.bf16.msra.mxu0 0
        %990 = vmatprep.subr.bf16.mxu0 0
        %991 = vmatpush2.bf16.msra.mxu0 %v938
        %992 = vmatprep.mubr.bf16.mxu0 %v949
        %993 = vmatmul.mubr.bf16.gmra.mxu0 %v858
        %v994 = vpop.f32.mrf.mxu0
        %v995 = vadd.f32 %v892, %v994
        %v996 = vpop.f32.mrf.mxu0
        %v997 = vpop.f32.mrf.mxu0
        %v998 = vadd.f32 %v892, %v997
        %v999 = vpop.f32.mrf.mxu0
        %1000 = vmatprep.mubr.bf16.mxu0 %v952
        %1001 = vmatmul.mubr.bf16.gmra.mxu0 %v861
        %v1002 = vpop.f32.mrf.mxu0
        %v1003 = vadd.f32 %v892, %v1002
        %v1004 = vpop.f32.mrf.mxu0
        %v1005 = vpop.f32.mrf.mxu0
        %v1006 = vadd.f32 %v892, %v1005
        %v1007 = vpop.f32.mrf.mxu0
        %1008 = vmatprep.mubr.bf16.mxu0 %v955
        %1009 = vmatmul.mubr.bf16.gmra.mxu0 %v864
        %v1010 = vpop.f32.mrf.mxu0
        %v1011 = vadd.f32 %v892, %v1010
        %v1012 = vpop.f32.mrf.mxu0
        %v1013 = vpop.f32.mrf.mxu0
        %v1014 = vadd.f32 %v892, %v1013
        %v1015 = vpop.f32.mrf.mxu0
        %1016 = vmatprep.mubr.bf16.mxu0 %v958
        %1017 = vmatmul.mubr.bf16.gmra.mxu0 %v867
        %v1018 = vpop.f32.mrf.mxu0
        %v1019 = vadd.f32 %v892, %v1018
        %v1020 = vpop.f32.mrf.mxu0
        %v1021 = vpop.f32.mrf.mxu0
        %v1022 = vadd.f32 %v892, %v1021
        %v1023 = vpop.f32.mrf.mxu0
        %1024 = vdwg.mxu0
        %v1025 = vmax.f32 %v995, 0.0
        %v1026 = vmax.f32 %v998, 0.0
        %v1027 = vmax.f32 %v1003, 0.0
        %v1028 = vmax.f32 %v1006, 0.0
        %v1029 = vmax.f32 %v1011, 0.0
        %v1030 = vmax.f32 %v1014, 0.0
        %v1031 = vmax.f32 %v1019, 0.0
        %v1032 = vmax.f32 %v1022, 0.0
        %1033 = vst.msk [vmem:[%s163] sm:$0xff] %vm811, %v1025
        %1034 = vst.msk [vmem:[%s163 + $0x8] sm:$0xff] %vm811, %v1026
        %1035 = vst.msk [vmem:[%s163 + $0x10] sm:$0xff] %vm811, %v1027
        %1036 = vst.msk [vmem:[%s163 + $0x18] sm:$0xff] %vm811, %v1028
        %1037 = vst.msk [vmem:[%s163 + $0x20] sm:$0xff] %vm811, %v1029
        %1038 = vst.msk [vmem:[%s163 + $0x28] sm:$0xff] %vm811, %v1030
        %1039 = vst.msk [vmem:[%s163 + $0x30] sm:$0xff] %vm811, %v1031
        %1040 = vst.msk [vmem:[%s163 + $0x38] sm:$0xff] %vm811, %v1032
        %s1041 = sand.u32 %s93, 1
        %s1042 = scalar_lea.sflag [#allocation3], %s1041
        %s1043 = sand.u32 %s93, 1
        %s1044 = smul.addr %s1043, 64
        %s1045 = scalar_lea.vmem [#allocation2], %s1044
        // Predicated region
        $region33: #{_lambda_.1} parent=31 // pred_check
          %p1046 = pneg %p103
        $region34: #{_lambda_.1} parent=31 // pred_check_branch
          %1048 = sbr.rel (%p1046) target = $region36
        $region35: #{_lambda_.1} parent=31 // pred_region
          %s1050 = ssub.s32 1024, 1024
          %1051 = vsyncadd %s1042, %s1050
          %s1052 = smul.addr %s17, 8
          %s1053 = smul.addr %s1052, 128
          %s1054 = scalar_lea.hbm %s3, %s1053
          %s1055 = sshll.u32 %s1045, 4
          %s1056 = int_to_ptr.vmem [resolvable:$true] %s1055
          %1061 = dma.vmem_to_hbm [thread:$0]  %s1056, 1024, %s1054, %s1042, 128, 128, 8
        $region36: #{_lambda_.1} parent=31 // pred_fallthru
          _
      $region32: #{_lambda_.1} parent=5 // pred_fallthru
        _
      %p1062 = scmp.le.s32.totalorder 2, %s12
      // Predicated region
      $region37: #{_lambda_.1} parent=5 // pred_check
        %p1063 = pneg %p1062
      $region38: #{_lambda_.1} parent=5 // pred_check_branch
        %1065 = sbr.rel (%p1063) target = $region40
      $region39: #{_lambda_.1} parent=5 // pred_region
        %s1066 = ssub.s32 %s12, 2
        // Predicated region
        $region41: #{_lambda_.1} parent=39 // pred_check
          %p1067 = pneg %p109
        $region42: #{_lambda_.1} parent=39 // pred_check_branch
          %1069 = sbr.rel (%p1067) target = $region44
        $region43: #{_lambda_.1} parent=39 // pred_region
          %s1070 = sand.u32 %s94, 1
          %s1071 = scalar_lea.sflag [#allocation3], %s1070
          %s1072 = sand.u32 %s94, 1
          %s1073 = smul.addr %s1072, 64
          %s1074 = scalar_lea.vmem [#allocation2], %s1073
          %1075 = dma.done %s1071, 1024
        $region44: #{_lambda_.1} parent=39 // pred_fallthru
          _
      $region40: #{_lambda_.1} parent=5 // pred_fallthru
        _
    $region6: #{_lambda_.1} parent=1 // loop_footer
      %s16 = sadd.s32 1, %s12
    $region7: #{_lambda_.1} parent=1 // loop_footer_branch
      %11 = sbr.rel target = $region3
    $region8: #{_lambda_.1} parent=1 // loop_exit
      _
    %1076 = vsyncpa [#allocation3], 1
    %s1077 = scalar_lea.sflag [#allocation3], 1
    %1078 = vsyncpa %s1077, 1

</llo_original>
